<compile_context>
chip_gen: v7x
topology: tpu7x:2x2x1
jax: 0.10.0
libtpu: 0.0.40
codegen_flags: <defaults>
</compile_context>

<pallas_src>
import functools

import jax
import jax.numpy as jnp
from jax.experimental import pallas as pl
from jax.experimental.pallas import tpu as pltpu

LANE = 128


# ----------------------------------------------------------------------------
# helpers
# ----------------------------------------------------------------------------
def _round_up(x, m):
    return ((x + m - 1) // m) * m


def _pad_axis(x, axis, target):
    cur = x.shape[axis]
    if cur == target:
        return x
    pads = [(0, 0)] * x.ndim
    pads[axis] = (0, target - cur)
    return jnp.pad(x, pads)


def _tpu_vmem_bytes():
    try:
        info = pltpu.get_tpu_info()
        v = getattr(info, "vmem_capacity_bytes", None)
        if v:
            return int(v)
    except Exception:
        pass
    return 64 * 1024 * 1024  # conservative: v7x per-TensorCore VMEM


def _plan_tiles(n_nodes, max_dout_p, a_bytes=2, z_bytes=2, out_bytes=4):
    """Pick (row_tile tm, padded_N, vmem_limit_bytes).

    Counts every double-buffered operand (A tile, Z_r slab, output tile) plus
    the f32 accumulator scratch.  tm is a multiple of 128 (MXU aligned) that
    divides the padded node count; prefer >= 2 row tiles so the "parallel"
    grid axis can shard across v7x's 2 TensorCores.
    """
    n_pad = _round_up(max(n_nodes, 1), LANE)
    n_chunks = n_pad // LANE
    vmem_total = _tpu_vmem_bytes()
    budget = min(int(vmem_total * 0.5), 48 * 1024 * 1024)

    def cost(tm):
        return (2 * tm * n_pad * a_bytes            # A tile, double buffered
                + 2 * n_pad * max_dout_p * z_bytes  # Z_r slab, double buffered
                + 2 * tm * max_dout_p * out_bytes   # output tile, double buffered
                + tm * max_dout_p * 4)              # f32 accumulator scratch

    divisors = sorted(
        {k for k in range(1, n_chunks + 1) if n_chunks % k == 0}, reverse=True)
    tm = LANE
    for k in divisors:
        if cost(LANE * k) <= budget:
            tm = LANE * k
            break
    if n_pad // tm == 1 and n_chunks >= 2:
        for k in divisors:
            if k < n_chunks and cost(LANE * k) <= budget:
                tm = LANE * k
                break
    vmem_limit = int(cost(tm) * 1.5) + (4 << 20)
    vmem_limit = max(16 * 1024 * 1024, min(vmem_limit, int(vmem_total * 0.9)))
    return tm, n_pad, vmem_limit


# ----------------------------------------------------------------------------
# Pallas kernel: out = sum_r A_r @ Z_r   (+ optional fused ReLU / cast)
# ----------------------------------------------------------------------------
def _rgcn_az_kernel(a_ref, z_ref, o_ref, acc_ref, *, apply_relu):
    r = pl.program_id(1)

    @pl.when(r == 0)
    def _():
        acc_ref[...] = jnp.zeros_like(acc_ref)

    acc_ref[...] += jnp.dot(a_ref[0], z_ref[0],
                            preferred_element_type=jnp.float32)

    @pl.when(r == pl.num_programs(1) - 1)
    def _():
        res = acc_ref[...]
        if apply_relu:
            res = jnp.maximum(res, 0.0)
        o_ref[...] = res.astype(o_ref.dtype)


def rgcn_spmm(A_pad, Z, *, apply_relu, out_dtype, tm, vmem_limit):
    """out = sum_r A_pad[r] @ Z[r].

    A_pad: (R, Np, Np) bf16, Z: (R, Np, Dp) bf16 -> (Np, Dp) out_dtype.
    Grid = (row tiles, relations); relations are the inner "arbitrary"
    reduction axis with an f32 accumulator resident in VMEM.
    """
    R, Np, _ = A_pad.shape
    Dp = Z.shape[-1]
    grid = (Np // tm, R)
    kernel = functools.partial(_rgcn_az_kernel, apply_relu=apply_relu)
    return pl.pallas_call(
        kernel,
        out_shape=jax.ShapeDtypeStruct((Np, Dp), out_dtype),
        grid_spec=pltpu.PrefetchScalarGridSpec(
            num_scalar_prefetch=0,
            grid=grid,
            in_specs=[
                pl.BlockSpec((1, tm, Np), lambda m, r: (r, m, 0)),
                pl.BlockSpec((1, Np, Dp), lambda m, r: (r, 0, 0)),
            ],
            out_specs=pl.BlockSpec((tm, Dp), lambda m, r: (m, 0)),
            scratch_shapes=[pltpu.VMEM((tm, Dp), jnp.float32)],
        ),
        compiler_params=pltpu.CompilerParams(
            dimension_semantics=("parallel", "arbitrary"),
            vmem_limit_bytes=vmem_limit),
    )(A_pad, Z)


# ----------------------------------------------------------------------------
# Model (plain-JAX glue around the Pallas kernel)
# ----------------------------------------------------------------------------
def _layer_dims(i, num_layer, input_size, hidden_size, output_size):
    if i == 0:
        return input_size + output_size, hidden_size
    if i == num_layer - 1:
        return hidden_size, output_size
    return hidden_size, hidden_size


def init_params(key, input_size, hidden_size, output_size, num_bases, num_rel,
                num_layer):
    params = {"layers": []}
    for i in range(num_layer):
        din, dout = _layer_dims(i, num_layer, input_size, hidden_size,
                                output_size)
        key, k1, k2 = jax.random.split(key, 3)
        scale = (6.0 / (din + dout)) ** 0.5
        w_bases = jax.random.uniform(k1, (num_bases, din, dout), jnp.float32,
                                     -scale, scale)
        w_rel = jax.random.uniform(k2, (num_rel, num_bases), jnp.float32,
                                   -1.0, 1.0) / num_bases
        params["layers"].append((w_rel, w_bases))
    key, k3 = jax.random.split(key)
    params["lambda_w"] = jax.random.uniform(
        k3, (output_size, 1), jnp.float32, -1.0, 1.0) / (output_size ** 0.5)
    params["lambda_b"] = jnp.zeros((1,), jnp.float32)
    # NOTE: fc1 (Linear(hidden, hidden)) exists in the PyTorch __init__ but is
    # never used in forward, so it is omitted here.
    return params


def _prepare_padded_weights(params, input_size, hidden_size, output_size,
                            num_layer, n_pad):
    """Hoisted out of the ponder loop: basis-decompose every layer's weight,
    split layer 0's featureless weight into the X part (W1) and the
    identity-feature part (W2), and zero-pad feature axes to 128-lane
    multiples.  Kept in f32; cast to bf16 only at the Z = X @ W stage."""
    out0_p = _round_up(output_size, LANE)   # width of h entering layer 0
    Ws = []
    for i, (w_rel, w_bases) in enumerate(params["layers"]):
        W = jnp.einsum("rb,bio->rio", w_rel, w_bases)        # (R, Din, Dout)
        din, dout = _layer_dims(i, num_layer, input_size, hidden_size,
                                output_size)
        dout_p = _round_up(dout, LANE)
        if i == 0:
            # featureless layer 0: supports_r = [A_r @ X | A_r]
            # TODO(synk): assumes the reference concatenates [X | identity];
            # if the layer orders them the other way, swap the two slices.
            W1 = _pad_axis(_pad_axis(W[:, :output_size, :], 1, out0_p), 2, dout_p)
            W2 = _pad_axis(_pad_axis(W[:, output_size:, :], 1, n_pad), 2, dout_p)
            Ws.append((W1, W2))
        else:
            din_p = _round_up(din, LANE)
            Ws.append(_pad_axis(_pad_axis(W, 1, din_p), 2, dout_p))
    return Ws, out0_p


def _make_apply_stack(num_layer, dropout_p, training, tm, vmem_limit,
                      compute_dtype=jnp.bfloat16):
    """One jitted call applies the whole R-GCN stack.  A_pad / Ws / h / key
    are jit ARGUMENTS (not closure constants)."""

    def apply_stack(A_pad, Ws, h, key):
        for i in range(num_layer):
            last = (i == num_layer - 1)
            if i == 0:
                W1, W2 = Ws[0]
                # fold: sum_r (A_r@h)@W1_r + A_r@W2_r == sum_r A_r@(h@W1_r + W2_r)
                Z = jnp.einsum("no,roh->rnh", h.astype(jnp.float32), W1) + W2
            else:
                Z = jnp.einsum("nd,rdo->rno", h.astype(jnp.float32), Ws[i])
            Z = Z.astype(compute_dtype)
            h = rgcn_spmm(A_pad, Z, apply_relu=not last,
                          out_dtype=jnp.float32 if last else compute_dtype,
                          tm=tm, vmem_limit=vmem_limit)
            if training and dropout_p > 0.0:
                key, sub = jax.random.split(key)
                keep = jax.random.bernoulli(sub, 1.0 - dropout_p, h.shape)
                h = jnp.where(keep, h / (1.0 - dropout_p), 0.0).astype(h.dtype)
        return h

    return jax.jit(apply_stack)


def ponder_rgcn_forward(params, A, *, input_size, hidden_size, output_size,
                        num_layer, dropout_p, max_steps, training=False,
                        key=None, compute_dtype=jnp.bfloat16):
    if key is None:
        key = jax.random.PRNGKey(42)
    R, N, N2 = A.shape
    if N != N2:
        raise ValueError("A must have shape (num_rel, N, N)")
    if N != input_size:
        # layer-0's identity-feature weight block has input_size rows
        raise ValueError("input_size must equal the number of nodes A.shape[1]")

    batch_size = input_size
    out0_p = _round_up(output_size, LANE)
    hid_p = _round_up(hidden_size, LANE)
    max_dout_p = max(out0_p, hid_p)
    itemsize = jnp.dtype(compute_dtype).itemsize
    tm, n_pad, vmem_limit = _plan_tiles(N, max_dout_p,
                                        a_bytes=itemsize, z_bytes=itemsize,
                                        out_bytes=4)

    # pad A ONCE per forward (rows + cols -> n_pad) and cast to compute dtype.
    # NOTE: bf16 A/Z with f32 accumulation diverges slightly from the f32
    # PyTorch reference; acceptable for this graph workload.
    A_pad = _pad_axis(_pad_axis(A, 1, n_pad), 2, n_pad).astype(compute_dtype)

    Ws, _ = _prepare_padded_weights(params, input_size, hidden_size,
                                    output_size, num_layer, n_pad)

    lam_w = params["lambda_w"]          # (output_size, 1)
    lam_b = params["lambda_b"]          # (1,)

    apply_stack = _make_apply_stack(num_layer, dropout_p, training, tm,
                                    vmem_limit, compute_dtype)

    # initial h = ones(N, output_size), zero-padded to the lane/row slab
    h = jnp.zeros((n_pad, out0_p), jnp.float32).at[:N, :output_size].set(1.0)
    key, ks = jax.random.split(key)
    h = apply_stack(A_pad, Ws, h, ks)

    p_list, y_list, lam_list = [], [], []
    un_halted_prob = jnp.ones((batch_size,), jnp.float32)
    halted = jnp.zeros((batch_size,), jnp.float32)

    for n in range(1, max_steps + 1):
        h_out = h[:batch_size, :output_size]          # strip lane/row padding
        if n == max_steps:
            lambda_n = jnp.ones((batch_size,), jnp.float32)
        else:
            lambda_n = jax.nn.sigmoid(h_out @ lam_w + lam_b)[:, 0]
        p_n = un_halted_prob * lambda_n
        un_halted_prob = un_halted_prob * (1.0 - lambda_n)
        key, kb = jax.random.split(key)
        halt = jax.random.bernoulli(
            kb, jnp.clip(lambda_n, 0.0, 1.0)).astype(jnp.float32) * (1.0 - halted)
        p_list.append(p_n)
        y_list.append(h_out)
        lam_list.append(lambda_n)
        halted = halted + halt
        # NOTE: the reference's p_m / y_m are computed but never returned, so
        # that dead work is dropped.
        if n == max_steps:
            break
        # Dispatch the next stack application BEFORE the blocking halt-sum
        # readback, so the device->host sync overlaps device compute.  If all
        # nodes halted, the speculative result is simply discarded.
        key, ks = jax.random.split(key)
        h_next = apply_stack(A_pad, Ws, h, ks)
        if bool(jnp.sum(halted) == batch_size):
            break
        h = h_next

    return jnp.stack(y_list), jnp.stack(p_list), jnp.stack(lam_list)


# ----------------------------------------------------------------------------
# Example
# ----------------------------------------------------------------------------
if __name__ == "__main__":
    # small, forward-consistent sizes
    input_size = 16      # number of graph nodes (== "batch_size" in forward)
    hidden_size = 32
    output_size = 8
    num_bases = 4
    num_rel = 3
    num_layer = 2
    dropout_p = 0.0      # eval-style run; dropout path is implemented above
    max_steps = 2

    root = jax.random.PRNGKey(0)
    k_param, k_adj, k_fwd = jax.random.split(root, 3)

    params = init_params(k_param, input_size, hidden_size, output_size,
                         num_bases, num_rel, num_layer)

    # dense (row-normalized) relation adjacency stack: [num_rel, N, N]
    A = jax.random.uniform(k_adj, (num_rel, input_size, input_size),
                           jnp.float32)
    A = A / jnp.sum(A, axis=-1, keepdims=True)

    y, p, lam = ponder_rgcn_forward(
        params, A,
        input_size=input_size, hidden_size=hidden_size,
        output_size=output_size, num_layer=num_layer,
        dropout_p=dropout_p, max_steps=max_steps, training=False, key=k_fwd)

    jax.block_until_ready((y, p, lam))
    assert y.shape[1:] == (input_size, output_size)
    assert p.shape[1:] == (input_size,)
    assert lam.shape[1:] == (input_size,)
    assert bool(jnp.all(jnp.isfinite(y))) and bool(jnp.all(jnp.isfinite(p)))
    print("KERNEL_OK")
</pallas_src>

<mosaic_0001>
module attributes {stable_mosaic.version = 11 : i64} {
  func.func @_rgcn_az_kernel(%arg0: i32, %arg1: i32, %arg2: memref<1x128x128xbf16, #tpu.memory_space<vmem>>, %arg3: memref<1x128x128xbf16, #tpu.memory_space<vmem>>, %arg4: memref<128x128xf32, #tpu.memory_space<vmem>>, %arg5: memref<128x128xf32, #tpu.memory_space<vmem>>) attributes {dimension_semantics = [#tpu.dimension_semantics<parallel>, #tpu.dimension_semantics<arbitrary>], iteration_bounds = array<i64: 1, 3>, scalar_prefetch = 0 : i64, scratch_operands = 1 : i64, tpu.core_type = #tpu.core_type<tc>, window_params = [{transform_indices = @transform_0, window_bounds = array<i64: 1, 128, 128>}, {transform_indices = @transform_1, window_bounds = array<i64: 1, 128, 128>}, {transform_indices = @transform_2, window_bounds = array<i64: 128, 128>}]} {
    %c0_i32 = arith.constant 0 : i32
    %0 = arith.cmpi eq, %arg1, %c0_i32 : i32
    %1 = arith.extui %0 : i1 to i32
    %c0_i32_0 = arith.constant 0 : i32
    %2 = arith.cmpi ne, %1, %c0_i32_0 : i32
    scf.if %2 {
      %cst_11 = arith.constant 0.000000e+00 : f32
      %14 = vector.broadcast %cst_11 : f32 to vector<128x128xf32>
      %c0_12 = arith.constant 0 : index
      %c0_13 = arith.constant 0 : index
      %15 = vector.load %arg5[%c0_12, %c0_13] : memref<128x128xf32, #tpu.memory_space<vmem>>, vector<128x128xf32>
      tpu.vector_store %arg5[%c0_12, %c0_13], %14 {strides = array<i32>} : memref<128x128xf32, #tpu.memory_space<vmem>>, vector<128x128xf32>,
    } else {
    }
    %c0 = arith.constant 0 : index
    %c0_1 = arith.constant 0 : index
    %3 = vector.load %arg5[%c0, %c0_1] : memref<128x128xf32, #tpu.memory_space<vmem>>, vector<128x128xf32>
    %c0_2 = arith.constant 0 : index
    %c0_3 = arith.constant 0 : index
    %c0_4 = arith.constant 0 : index
    %4 = vector.load %arg2[%c0_2, %c0_3, %c0_4] : memref<1x128x128xbf16, #tpu.memory_space<vmem>>, vector<1x128x128xbf16>
    %5 = vector.shape_cast %4 : vector<1x128x128xbf16> to vector<128x128xbf16>
    %c0_5 = arith.constant 0 : index
    %c0_6 = arith.constant 0 : index
    %c0_7 = arith.constant 0 : index
    %6 = vector.load %arg3[%c0_5, %c0_6, %c0_7] : memref<1x128x128xbf16, #tpu.memory_space<vmem>>, vector<1x128x128xbf16>
    %7 = vector.shape_cast %6 : vector<1x128x128xbf16> to vector<128x128xbf16>
    %cst = arith.constant dense<0.000000e+00> : vector<128x128xf32>
    %8 = tpu.matmul %5, %7, %cst {dimension_numbers = #tpu.dot_dimension_numbers<[1], [0], [0], [1], [0, 0, 1, 1], [], []>} : vector<128x128xbf16>, vector<128x128xbf16>, vector<128x128xf32> -> vector<128x128xf32>
    %9 = arith.addf %3, %8 : vector<128x128xf32>
    %c0_8 = arith.constant 0 : index
    %c0_9 = arith.constant 0 : index
    %10 = vector.load %arg5[%c0_8, %c0_9] : memref<128x128xf32, #tpu.memory_space<vmem>>, vector<128x128xf32>
    tpu.vector_store %arg5[%c0_8, %c0_9], %9 {strides = array<i32>} : memref<128x128xf32, #tpu.memory_space<vmem>>, vector<128x128xf32>,
    %c2_i32 = arith.constant 2 : i32
    %11 = arith.cmpi eq, %arg1, %c2_i32 : i32
    %12 = arith.extui %11 : i1 to i32
    %c0_i32_10 = arith.constant 0 : i32
    %13 = arith.cmpi ne, %12, %c0_i32_10 : i32
    scf.if %13 {
      %c0_11 = arith.constant 0 : index
      %c0_12 = arith.constant 0 : index
      %14 = vector.load %arg5[%c0_11, %c0_12] : memref<128x128xf32, #tpu.memory_space<vmem>>, vector<128x128xf32>
      %c0_13 = arith.constant 0 : index
      %c0_14 = arith.constant 0 : index
      %15 = vector.load %arg4[%c0_13, %c0_14] : memref<128x128xf32, #tpu.memory_space<vmem>>, vector<128x128xf32>
      tpu.vector_store %arg4[%c0_13, %c0_14], %14 {strides = array<i32>} : memref<128x128xf32, #tpu.memory_space<vmem>>, vector<128x128xf32>,
    } else {
    }
    return
  }
  func.func @transform_0(%arg0: i32, %arg1: i32) -> (i32, i32, i32) {
    %c0_i32 = arith.constant 0 : i32
    %c0_i32_0 = arith.constant 0 : i32
    return %arg1, %arg0, %c0_i32 : i32, i32, i32
  }
  func.func @transform_1(%arg0: i32, %arg1: i32) -> (i32, i32, i32) {
    %c0_i32 = arith.constant 0 : i32
    %c0_i32_0 = arith.constant 0 : i32
    %c0_i32_1 = arith.constant 0 : i32
    return %arg1, %c0_i32, %c0_i32_0 : i32, i32, i32
  }
  func.func @transform_2(%arg0: i32, %arg1: i32) -> (i32, i32) {
    %c0_i32 = arith.constant 0 : i32
    %c0_i32_0 = arith.constant 0 : i32
    return %arg0, %c0_i32 : i32, i32
  }
}

module attributes {stable_mosaic.version = 11 : i64} {
  func.func @_rgcn_az_kernel(%arg0: i32, %arg1: i32, %arg2: memref<1x128x128xbf16, #tpu.memory_space<vmem>>, %arg3: memref<1x128x128xbf16, #tpu.memory_space<vmem>>, %arg4: memref<128x128xbf16, #tpu.memory_space<vmem>>, %arg5: memref<128x128xf32, #tpu.memory_space<vmem>>) attributes {dimension_semantics = [#tpu.dimension_semantics<parallel>, #tpu.dimension_semantics<arbitrary>], iteration_bounds = array<i64: 1, 3>, scalar_prefetch = 0 : i64, scratch_operands = 1 : i64, tpu.core_type = #tpu.core_type<tc>, window_params = [{transform_indices = @transform_0, window_bounds = array<i64: 1, 128, 128>}, {transform_indices = @transform_1, window_bounds = array<i64: 1, 128, 128>}, {transform_indices = @transform_2, window_bounds = array<i64: 128, 128>}]} {
    %c0_i32 = arith.constant 0 : i32
    %0 = arith.cmpi eq, %arg1, %c0_i32 : i32
    %1 = arith.extui %0 : i1 to i32
    %c0_i32_0 = arith.constant 0 : i32
    %2 = arith.cmpi ne, %1, %c0_i32_0 : i32
    scf.if %2 {
      %cst_11 = arith.constant 0.000000e+00 : f32
      %14 = vector.broadcast %cst_11 : f32 to vector<128x128xf32>
      %c0_12 = arith.constant 0 : index
      %c0_13 = arith.constant 0 : index
      %15 = vector.load %arg5[%c0_12, %c0_13] : memref<128x128xf32, #tpu.memory_space<vmem>>, vector<128x128xf32>
      tpu.vector_store %arg5[%c0_12, %c0_13], %14 {strides = array<i32>} : memref<128x128xf32, #tpu.memory_space<vmem>>, vector<128x128xf32>,
    } else {
    }
    %c0 = arith.constant 0 : index
    %c0_1 = arith.constant 0 : index
    %3 = vector.load %arg5[%c0, %c0_1] : memref<128x128xf32, #tpu.memory_space<vmem>>, vector<128x128xf32>
    %c0_2 = arith.constant 0 : index
    %c0_3 = arith.constant 0 : index
    %c0_4 = arith.constant 0 : index
    %4 = vector.load %arg2[%c0_2, %c0_3, %c0_4] : memref<1x128x128xbf16, #tpu.memory_space<vmem>>, vector<1x128x128xbf16>
    %5 = vector.shape_cast %4 : vector<1x128x128xbf16> to vector<128x128xbf16>
    %c0_5 = arith.constant 0 : index
    %c0_6 = arith.constant 0 : index
    %c0_7 = arith.constant 0 : index
    %6 = vector.load %arg3[%c0_5, %c0_6, %c0_7] : memref<1x128x128xbf16, #tpu.memory_space<vmem>>, vector<1x128x128xbf16>
    %7 = vector.shape_cast %6 : vector<1x128x128xbf16> to vector<128x128xbf16>
    %cst = arith.constant dense<0.000000e+00> : vector<128x128xf32>
    %8 = tpu.matmul %5, %7, %cst {dimension_numbers = #tpu.dot_dimension_numbers<[1], [0], [0], [1], [0, 0, 1, 1], [], []>} : vector<128x128xbf16>, vector<128x128xbf16>, vector<128x128xf32> -> vector<128x128xf32>
    %9 = arith.addf %3, %8 : vector<128x128xf32>
    %c0_8 = arith.constant 0 : index
    %c0_9 = arith.constant 0 : index
    %10 = vector.load %arg5[%c0_8, %c0_9] : memref<128x128xf32, #tpu.memory_space<vmem>>, vector<128x128xf32>
    tpu.vector_store %arg5[%c0_8, %c0_9], %9 {strides = array<i32>} : memref<128x128xf32, #tpu.memory_space<vmem>>, vector<128x128xf32>,
    %c2_i32 = arith.constant 2 : i32
    %11 = arith.cmpi eq, %arg1, %c2_i32 : i32
    %12 = arith.extui %11 : i1 to i32
    %c0_i32_10 = arith.constant 0 : i32
    %13 = arith.cmpi ne, %12, %c0_i32_10 : i32
    scf.if %13 {
      %c0_11 = arith.constant 0 : index
      %c0_12 = arith.constant 0 : index
      %14 = vector.load %arg5[%c0_11, %c0_12] : memref<128x128xf32, #tpu.memory_space<vmem>>, vector<128x128xf32>
      %cst_13 = arith.constant 0.000000e+00 : f32
      %15 = vector.broadcast %cst_13 : f32 to vector<128x128xf32>
      %16 = arith.maximumf %14, %15 : vector<128x128xf32>
      %17 = arith.truncf %16 : vector<128x128xf32> to vector<128x128xbf16>
      %c0_14 = arith.constant 0 : index
      %c0_15 = arith.constant 0 : index
      %18 = vector.load %arg4[%c0_14, %c0_15] : memref<128x128xbf16, #tpu.memory_space<vmem>>, vector<128x128xbf16>
      tpu.vector_store %arg4[%c0_14, %c0_15], %17 {strides = array<i32>} : memref<128x128xbf16, #tpu.memory_space<vmem>>, vector<128x128xbf16>,
    } else {
    }
    return
  }
  func.func @transform_0(%arg0: i32, %arg1: i32) -> (i32, i32, i32) {
    %c0_i32 = arith.constant 0 : i32
    %c0_i32_0 = arith.constant 0 : i32
    return %arg1, %arg0, %c0_i32 : i32, i32, i32
  }
  func.func @transform_1(%arg0: i32, %arg1: i32) -> (i32, i32, i32) {
    %c0_i32 = arith.constant 0 : i32
    %c0_i32_0 = arith.constant 0 : i32
    %c0_i32_1 = arith.constant 0 : i32
    return %arg1, %c0_i32, %c0_i32_0 : i32, i32, i32
  }
  func.func @transform_2(%arg0: i32, %arg1: i32) -> (i32, i32) {
    %c0_i32 = arith.constant 0 : i32
    %c0_i32_0 = arith.constant 0 : i32
    return %arg0, %c0_i32 : i32, i32
  }
}

</mosaic_0001>

<llo_original>
// kernel: apply_stack.3
$region0: #{apply_stack.3}
  #allocation0 [shape = 'u32[]', space=smem, size = 0x4, offset = 0x4, fixed_abs, tag = 'smem constant byte address 0x4 - core index']
  #allocation1 [shape = 'u32[144,128]{1,0:T(1,128)}', space=vmem, size = 0x12000, scoped, tag = 'internal scratch']
  #allocation2 [shape = 'f32[128,128]{1,0:T(8,128)}', space=vmem, size = 0x10000, scoped, tag = 'scratch operand']
  %s0 = inlined_call_operand.vmem [shape: bf16[3,128,128], index: 0, kind: input, shape index: {}]
  %s1 = inlined_call_operand.vmem [shape: bf16[3,128,128], index: 1, kind: input, shape index: {}]
  %s2 = inlined_call_operand.hbm [shape: f32[128,128], index: 2, kind: output, shape index: {}]
  %s3 = sld [smem:[#allocation0]]
  $region49: #{apply_stack.3} parent=0
    _
  %s5 = ssub.s32 1, %s3
  %s6 = scalar_select 0, %s5, %s3
  $region1: #{apply_stack.3} parent=0
    #allocation3 [shape = 'u8[65536]{0}', space=vmem, size = 0x10000, scoped, tag = 'output window, operand 0, single buffered']
    #allocation4 [shape = 's32[2]{0}', space=sflag, size = 0x8, scoped, tag = 'scoped memory for apply_stack.3']
    %7 = vsyncpa [#allocation4], 0
    loop: start=0, step=1, limit=5
    $region2: #{apply_stack.3} parent=1 // loop_pre_header
      _
    $region3: #{apply_stack.3} parent=1 // loop_header
      %s9 = sphi 0, %s13
      %p10 = scmp.ge.s32.totalorder %s9, 5
      %s16 = sphi 0, %s28
      %s17 = sphi 0, %s24
      %s18 = sphi 0, %s16
      %s19 = sphi 0, %s17
      %s20 = sphi 0, %s18
      %s21 = sphi 0, %s19
      %s33 = sphi 0, %s35
      %s36 = sphi 0, %s33
      %s37 = sphi 0, %s36
      %s53 = sphi 0, %s37
      %s59 = sphi 0, %s61
      %s62 = sphi 0, %s59
      %s63 = sphi 0, %s62
      %s79 = sphi 0, %s63
      %s85 = sphi 0, %s87
      %s88 = sphi 0, %s85
      %s89 = sphi 0, %s88
      %s105 = sphi 0, %s89
    $region4: #{apply_stack.3} parent=1 // loop_header_branch
      %12 = sbr.rel (%p10) target = $region8
    $region5: #{apply_stack.3} parent=1 // loop_body
      %s14 = ssub.s32 %s9, 1
      %s15 = ssub.s32 %s9, 2
      %s22 = sadd.s32 1, %s17
      %p23 = scmp.ge.s32.totalorder %s22, 3
      %s24 = scalar_select %p23, 0, %s22
      %s25 = sadd.s32 1, %s16
      %s26 = scalar_select %p23, %s25, %s16
      %p27 = scmp.ge.s32.totalorder %s26, 1
      %s28 = scalar_select %p27, 0, %s26
      %s29 = ssub.s32 %s17, %s24
      %s30 = ssub.s32 %s16, %s28
      %s31 = sor.u32 %s29, %s30
      %p32 = scmp.eq.s32.totalorder %s31, 0
      %s34 = sadd.s32 %s33, 1
      %s35 = scalar_select %p32, %s33, %s34
      %p38 = pneg %p32
      %p39 = scmp.eq.s32.totalorder %s9, 2
      %p40 = por %p38, %p39
      %p41 = scmp.ne.s32.totalorder %s33, %s36
      %p42 = scmp.eq.s32.totalorder %s9, 0
      %p43 = por %p41, %p42
      %p44 = scmp.ne.s32.totalorder %s33, %s36
      %p45 = scmp.eq.s32.totalorder %s14, 2
      %p46 = por %p44, %p45
      %p47 = scmp.ne.s32.totalorder %s36, %s37
      %p48 = scmp.eq.s32.totalorder %s14, 0
      %p49 = por %p47, %p48
      %p50 = scmp.ne.s32.totalorder %s36, %s37
      %p51 = scmp.eq.s32.totalorder %s15, 2
      %p52 = por %p50, %p51
      %p54 = scmp.ne.s32.totalorder %s37, %s53
      %p55 = scmp.eq.s32.totalorder %s15, 0
      %p56 = por %p54, %p55
      %s57 = ssub.s32 %s17, %s24
      %p58 = scmp.eq.s32.totalorder %s57, 0
      %s60 = sadd.s32 %s59, 1
      %s61 = scalar_select %p58, %s59, %s60
      %p64 = pneg %p58
      %p65 = scmp.eq.s32.totalorder %s9, 2
      %p66 = por %p64, %p65
      %p67 = scmp.ne.s32.totalorder %s59, %s62
      %p68 = scmp.eq.s32.totalorder %s9, 0
      %p69 = por %p67, %p68
      %p70 = scmp.ne.s32.totalorder %s59, %s62
      %p71 = scmp.eq.s32.totalorder %s14, 2
      %p72 = por %p70, %p71
      %p73 = scmp.ne.s32.totalorder %s62, %s63
      %p74 = scmp.eq.s32.totalorder %s14, 0
      %p75 = por %p73, %p74
      %p76 = scmp.ne.s32.totalorder %s62, %s63
      %p77 = scmp.eq.s32.totalorder %s15, 2
      %p78 = por %p76, %p77
      %p80 = scmp.ne.s32.totalorder %s63, %s79
      %p81 = scmp.eq.s32.totalorder %s15, 0
      %p82 = por %p80, %p81
      %s83 = ssub.s32 %s16, %s28
      %p84 = scmp.eq.s32.totalorder %s83, 0
      %s86 = sadd.s32 %s85, 1
      %s87 = scalar_select %p84, %s85, %s86
      %p90 = pneg %p84
      %p91 = scmp.eq.s32.totalorder %s9, 2
      %p92 = por %p90, %p91
      %p93 = scmp.ne.s32.totalorder %s85, %s88
      %p94 = scmp.eq.s32.totalorder %s9, 0
      %p95 = por %p93, %p94
      %p96 = scmp.ne.s32.totalorder %s85, %s88
      %p97 = scmp.eq.s32.totalorder %s14, 2
      %p98 = por %p96, %p97
      %p99 = scmp.ne.s32.totalorder %s88, %s89
      %p100 = scmp.eq.s32.totalorder %s14, 0
      %p101 = por %p99, %p100
      %p102 = scmp.ne.s32.totalorder %s88, %s89
      %p103 = scmp.eq.s32.totalorder %s15, 2
      %p104 = por %p102, %p103
      %p106 = scmp.ne.s32.totalorder %s89, %s105
      %p107 = scmp.eq.s32.totalorder %s15, 0
      %p108 = por %p106, %p107
      %p109 = scmp.le.s32.totalorder 1, %s9
      %p110 = scmp.lt.s32.totalorder %s9, 4
      %p111 = pnand %p109, %p110
      %p112 = pneg %p111
      // Predicated region
      $region9: #{apply_stack.3} parent=5 // pred_check
        _
      $region10: #{apply_stack.3} parent=5 // pred_check_branch
        %114 = sbr.rel (%p111) target = $region12
      $region11: #{apply_stack.3} parent=5 // pred_region
        %s115 = ssub.s32 %s9, 1
      $region12: #{apply_stack.3} parent=5 // pred_fallthru
        _
      %p116 = scmp.lt.s32.totalorder %s9, 3
      // Predicated region
      $region13: #{apply_stack.3} parent=5 // pred_check
        %p117 = pneg %p116
      $region14: #{apply_stack.3} parent=5 // pred_check_branch
        %119 = sbr.rel (%p117) target = $region16
      $region15: #{apply_stack.3} parent=5 // pred_region
        // Predicated region
        $region17: #{apply_stack.3} parent=15 // pred_check
          %p120 = pneg %p43
        $region18: #{apply_stack.3} parent=15 // pred_check_branch
          %122 = sbr.rel (%p120) target = $region20
        $region19: #{apply_stack.3} parent=15 // pred_region
          %s123 = smul.u32 16, %s16
          %p124 = scmp.lt.s32.totalorder %s17, 2
          %s125 = scalar_select %p124, %s17, 2
          %p126 = scmp.lt.s32.totalorder %s123, 15
          %s127 = scalar_select %p126, %s123, 15
          %s128 = smul.addr %s125, 16
          %s129 = sadd.s32 %s127, %s128
          %s130 = smul.addr %s129, 4
          %s131 = scalar_lea.vmem %s0, %s130
          %s132 = smul.u32 16, %s16
        $region20: #{apply_stack.3} parent=15 // pred_fallthru
          _
        // Predicated region
        $region21: #{apply_stack.3} parent=15 // pred_check
          %p133 = pneg %p69
        $region22: #{apply_stack.3} parent=15 // pred_check_branch
          %135 = sbr.rel (%p133) target = $region24
        $region23: #{apply_stack.3} parent=15 // pred_region
          %p136 = scmp.lt.s32.totalorder %s17, 2
          %s137 = scalar_select %p136, %s17, 2
          %s138 = smul.addr %s137, 16
          %s139 = smul.addr %s138, 4
          %s140 = scalar_lea.vmem %s1, %s139
        $region24: #{apply_stack.3} parent=15 // pred_fallthru
          _
      $region16: #{apply_stack.3} parent=5 // pred_fallthru
        _
      %p141 = scmp.le.s32.totalorder 1, %s9
      %p142 = scmp.lt.s32.totalorder %s9, 4
      %p143 = pnand %p141, %p142
      %p144 = pneg %p143
      // Predicated region
      $region25: #{apply_stack.3} parent=5 // pred_check
        _
      $region26: #{apply_stack.3} parent=5 // pred_check_branch
        %146 = sbr.rel (%p143) target = $region28
      $region27: #{apply_stack.3} parent=5 // pred_region
        %s147 = ssub.s32 %s9, 1
        %s148 = smul.u32 16, %s18
        %p149 = scmp.lt.s32.totalorder %s19, 2
        %s150 = scalar_select %p149, %s19, 2
        %p151 = scmp.lt.s32.totalorder %s148, 15
        %s152 = scalar_select %p151, %s148, 15
        %s153 = smul.addr %s150, 16
        %s154 = sadd.s32 %s152, %s153
        %s155 = smul.addr %s154, 4
        %s156 = scalar_lea.vmem %s0, %s155
        %p157 = pneg %p49
        %p158 = pneg %p46
        %p159 = scmp.lt.s32.totalorder %s19, 2
        %s160 = scalar_select %p159, %s19, 2
        %s161 = smul.addr %s160, 16
        %s162 = smul.addr %s161, 4
        %s163 = scalar_lea.vmem %s1, %s162
        %p164 = pneg %p75
        %p165 = pneg %p72
        %p166 = pneg %p101
        %p167 = pneg %p98
        %s168 = smul.u32 16, %s18
        %p169 = scmp.lt.s32.totalorder %s19, 2
        %s170 = scalar_select %p169, %s19, 2
        %p171 = scmp.lt.s32.totalorder %s168, 15
        %s172 = scalar_select %p171, %s168, 15
        %s173 = smul.addr %s170, 16
        %s174 = sadd.s32 %s172, %s173
        %s175 = smul.addr %s174, 4
        %s176 = scalar_lea.vmem %s0, %s175
        %s177 = smul.u32 16, %s18
        %p178 = scmp.lt.s32.totalorder %s19, 2
        %s179 = scalar_select %p178, %s19, 2
        %s180 = smul.addr %s179, 16
        %s181 = smul.addr %s180, 4
        %s182 = scalar_lea.vmem %s1, %s181
        %s183 = smul.u32 16, %s18
        %p185 = scmp.eq.s32.totalorder %s19, 0
        // Predicated region
        $region29: #{apply_stack.3} parent=27 // pred_check
          %p186 = pneg %p185
        $region30: #{apply_stack.3} parent=27 // pred_check_branch
          %188 = sbr.rel (%p186) target = $region32
        $region31: #{apply_stack.3} parent=27 // pred_region
          %189 = vst [vmem:[#allocation2] sm:$0xff] 0.0
          %190 = vst [vmem:[#allocation2 + $0x8] sm:$0xff] 0.0
          %191 = vst [vmem:[#allocation2 + $0x10] sm:$0xff] 0.0
          %192 = vst [vmem:[#allocation2 + $0x18] sm:$0xff] 0.0
          %193 = vst [vmem:[#allocation2 + $0x20] sm:$0xff] 0.0
          %194 = vst [vmem:[#allocation2 + $0x28] sm:$0xff] 0.0
          %195 = vst [vmem:[#allocation2 + $0x30] sm:$0xff] 0.0
          %196 = vst [vmem:[#allocation2 + $0x38] sm:$0xff] 0.0
          %197 = vst [vmem:[#allocation2 + $0x40] sm:$0xff] 0.0
          %198 = vst [vmem:[#allocation2 + $0x48] sm:$0xff] 0.0
          %199 = vst [vmem:[#allocation2 + $0x50] sm:$0xff] 0.0
          %200 = vst [vmem:[#allocation2 + $0x58] sm:$0xff] 0.0
          %201 = vst [vmem:[#allocation2 + $0x60] sm:$0xff] 0.0
          %202 = vst [vmem:[#allocation2 + $0x68] sm:$0xff] 0.0
          %203 = vst [vmem:[#allocation2 + $0x70] sm:$0xff] 0.0
          %204 = vst [vmem:[#allocation2 + $0x78] sm:$0xff] 0.0
        $region32: #{apply_stack.3} parent=27 // pred_fallthru
          _
        %v205 = vld [vmem:[#allocation2] sm:$0xff]
        %v206 = vld [vmem:[#allocation2 + $0x8] sm:$0xff]
        %v207 = vld [vmem:[#allocation2 + $0x10] sm:$0xff]
        %v208 = vld [vmem:[#allocation2 + $0x18] sm:$0xff]
        %v209 = vld [vmem:[#allocation2 + $0x20] sm:$0xff]
        %v210 = vld [vmem:[#allocation2 + $0x28] sm:$0xff]
        %v211 = vld [vmem:[#allocation2 + $0x30] sm:$0xff]
        %v212 = vld [vmem:[#allocation2 + $0x38] sm:$0xff]
        %v213 = vld [vmem:[#allocation2 + $0x40] sm:$0xff]
        %v214 = vld [vmem:[#allocation2 + $0x48] sm:$0xff]
        %v215 = vld [vmem:[#allocation2 + $0x50] sm:$0xff]
        %v216 = vld [vmem:[#allocation2 + $0x58] sm:$0xff]
        %v217 = vld [vmem:[#allocation2 + $0x60] sm:$0xff]
        %v218 = vld [vmem:[#allocation2 + $0x68] sm:$0xff]
        %v219 = vld [vmem:[#allocation2 + $0x70] sm:$0xff]
        %v220 = vld [vmem:[#allocation2 + $0x78] sm:$0xff]
        %v221 = vld [vmem:[%s176] sm:$0xf]
        %v222 = vld [vmem:[%s176 + $0x4] sm:$0xf]
        %v223 = vld [vmem:[%s176 + $0x8] sm:$0xf]
        %v224 = vld [vmem:[%s176 + $0xc] sm:$0xf]
        %v225 = vld [vmem:[%s176 + $0x10] sm:$0xf]
        %v226 = vld [vmem:[%s176 + $0x14] sm:$0xf]
        %v227 = vld [vmem:[%s176 + $0x18] sm:$0xf]
        %v228 = vld [vmem:[%s176 + $0x1c] sm:$0xf]
        %v229 = vld [vmem:[%s176 + $0x20] sm:$0xf]
        %v230 = vld [vmem:[%s176 + $0x24] sm:$0xf]
        %v231 = vld [vmem:[%s176 + $0x28] sm:$0xf]
        %v232 = vld [vmem:[%s176 + $0x2c] sm:$0xf]
        %v233 = vld [vmem:[%s176 + $0x30] sm:$0xf]
        %v234 = vld [vmem:[%s176 + $0x34] sm:$0xf]
        %v235 = vld [vmem:[%s176 + $0x38] sm:$0xf]
        %v236 = vld [vmem:[%s176 + $0x3c] sm:$0xf]
        %v237 = vld [vmem:[%s182] sm:$0xf]
        %v238 = vld [vmem:[%s182 + $0x4] sm:$0xf]
        %v239 = vld [vmem:[%s182 + $0x8] sm:$0xf]
        %v240 = vld [vmem:[%s182 + $0xc] sm:$0xf]
        %v241 = vld [vmem:[%s182 + $0x10] sm:$0xf]
        %v242 = vld [vmem:[%s182 + $0x14] sm:$0xf]
        %v243 = vld [vmem:[%s182 + $0x18] sm:$0xf]
        %v244 = vld [vmem:[%s182 + $0x1c] sm:$0xf]
        %v245 = vld [vmem:[%s182 + $0x20] sm:$0xf]
        %v246 = vld [vmem:[%s182 + $0x24] sm:$0xf]
        %v247 = vld [vmem:[%s182 + $0x28] sm:$0xf]
        %v248 = vld [vmem:[%s182 + $0x2c] sm:$0xf]
        %v249 = vld [vmem:[%s182 + $0x30] sm:$0xf]
        %v250 = vld [vmem:[%s182 + $0x34] sm:$0xf]
        %v251 = vld [vmem:[%s182 + $0x38] sm:$0xf]
        %v252 = vld [vmem:[%s182 + $0x3c] sm:$0xf]
        %v269 = vunpack.c.l.b16 %v221
        %v270 = vunpack.c.l.b16 %v222
        %v271 = vunpack.c.l.b16 %v223
        %v272 = vunpack.c.l.b16 %v224
        %v273 = vunpack.c.l.b16 %v225
        %v274 = vunpack.c.l.b16 %v226
        %v275 = vunpack.c.l.b16 %v227
        %v276 = vunpack.c.l.b16 %v228
        %v277 = vunpack.c.l.b16 %v229
        %v278 = vunpack.c.l.b16 %v230
        %v279 = vunpack.c.l.b16 %v231
        %v280 = vunpack.c.l.b16 %v232
        %v281 = vunpack.c.l.b16 %v233
        %v282 = vunpack.c.l.b16 %v234
        %v283 = vunpack.c.l.b16 %v235
        %v284 = vunpack.c.l.b16 %v236
        %v285 = vpack.c.b16 %v270, %v269
        %v286 = vpack.c.b16 %v272, %v271
        %v287 = vpack.c.b16 %v274, %v273
        %v288 = vpack.c.b16 %v276, %v275
        %v289 = vpack.c.b16 %v278, %v277
        %v290 = vpack.c.b16 %v280, %v279
        %v291 = vpack.c.b16 %v282, %v281
        %v292 = vpack.c.b16 %v284, %v283
        %v317 = vunpack.c.l.b16 %v237
        %v318 = vunpack.c.l.b16 %v238
        %v319 = vunpack.c.l.b16 %v239
        %v320 = vunpack.c.l.b16 %v240
        %v321 = vunpack.c.l.b16 %v241
        %v322 = vunpack.c.l.b16 %v242
        %v323 = vunpack.c.l.b16 %v243
        %v324 = vunpack.c.l.b16 %v244
        %v325 = vunpack.c.l.b16 %v245
        %v326 = vunpack.c.l.b16 %v246
        %v327 = vunpack.c.l.b16 %v247
        %v328 = vunpack.c.l.b16 %v248
        %v329 = vunpack.c.l.b16 %v249
        %v330 = vunpack.c.l.b16 %v250
        %v331 = vunpack.c.l.b16 %v251
        %v332 = vunpack.c.l.b16 %v252
        %v333 = vpack.c.b16 %v318, %v317
        %v334 = vpack.c.b16 %v320, %v319
        %v335 = vpack.c.b16 %v322, %v321
        %v336 = vpack.c.b16 %v324, %v323
        %v337 = vpack.c.b16 %v326, %v325
        %v338 = vpack.c.b16 %v328, %v327
        %v339 = vpack.c.b16 %v330, %v329
        %v340 = vpack.c.b16 %v332, %v331
        %349 = vmatprep.subr.bf16.mxu0 0
        %350 = vmatpush1.bf16.msra.mxu0 %v333
        %351 = vmatprep.subr.bf16.mxu0 0
        %352 = vmatpush1.bf16.msra.mxu0 %v334
        %353 = vmatprep.subr.bf16.mxu0 0
        %354 = vmatpush1.bf16.msra.mxu0 %v335
        %355 = vmatprep.subr.bf16.mxu0 0
        %356 = vmatpush1.bf16.msra.mxu0 %v336
        %357 = vmatprep.subr.bf16.mxu0 0
        %358 = vmatpush1.bf16.msra.mxu0 %v337
        %359 = vmatprep.subr.bf16.mxu0 0
        %360 = vmatpush1.bf16.msra.mxu0 %v338
        %361 = vmatprep.subr.bf16.mxu0 0
        %362 = vmatpush1.bf16.msra.mxu0 %v339
        %363 = vmatprep.subr.bf16.mxu0 0
        %364 = vmatpush1.bf16.msra.mxu0 %v340
        %365 = vmatprep.subr.bf16.mxu0 0
        %366 = vmatpush1.bf16.msra.mxu0 0
        %367 = vmatprep.subr.bf16.mxu0 0
        %368 = vmatpush1.bf16.msra.mxu0 0
        %369 = vmatprep.subr.bf16.mxu0 0
        %370 = vmatpush1.bf16.msra.mxu0 0
        %371 = vmatprep.subr.bf16.mxu0 0
        %372 = vmatpush1.bf16.msra.mxu0 0
        %373 = vmatprep.subr.bf16.mxu0 0
        %374 = vmatpush1.bf16.msra.mxu0 0
        %375 = vmatprep.subr.bf16.mxu0 0
        %376 = vmatpush1.bf16.msra.mxu0 0
        %377 = vmatprep.subr.bf16.mxu0 0
        %378 = vmatpush1.bf16.msra.mxu0 0
        %379 = vmatprep.subr.bf16.mxu0 0
        %380 = vmatpush1.bf16.msra.mxu0 0
        %381 = vmatprep.mubr.bf16.mxu0 0
        %382 = vmatmul.mubr.bf16.gmra.mrb[0].mxu0 %v285
        %v383 = vpop.f32.mrb[0].mxu0
        %v384 = vadd.f32 0.0, %v383
        %v385 = vpop.f32.mrb[0].mxu0
        %v386 = vpop.f32.mrb[0].mxu0
        %v387 = vadd.f32 0.0, %v386
        %v388 = vpop.f32.mrb[0].mxu0
        %389 = vmatprep.mubr.bf16.mxu0 0
        %390 = vmatmul.mubr.bf16.gmra.mrb[0].mxu0 %v286
        %v391 = vpop.f32.mrb[0].mxu0
        %v392 = vadd.f32 0.0, %v391
        %v393 = vpop.f32.mrb[0].mxu0
        %v394 = vpop.f32.mrb[0].mxu0
        %v395 = vadd.f32 0.0, %v394
        %v396 = vpop.f32.mrb[0].mxu0
        %397 = vmatprep.mubr.bf16.mxu0 0
        %398 = vmatmul.mubr.bf16.gmra.mrb[0].mxu0 %v287
        %v399 = vpop.f32.mrb[0].mxu0
        %v400 = vadd.f32 0.0, %v399
        %v401 = vpop.f32.mrb[0].mxu0
        %v402 = vpop.f32.mrb[0].mxu0
        %v403 = vadd.f32 0.0, %v402
        %v404 = vpop.f32.mrb[0].mxu0
        %405 = vmatprep.mubr.bf16.mxu0 0
        %406 = vmatmul.mubr.bf16.gmra.mrb[0].mxu0 %v288
        %v407 = vpop.f32.mrb[0].mxu0
        %v408 = vadd.f32 0.0, %v407
        %v409 = vpop.f32.mrb[0].mxu0
        %v410 = vpop.f32.mrb[0].mxu0
        %v411 = vadd.f32 0.0, %v410
        %v412 = vpop.f32.mrb[0].mxu0
        %413 = vmatprep.mubr.bf16.mxu0 0
        %414 = vmatmul.mubr.bf16.gmra.mrb[0].mxu0 %v289
        %v415 = vpop.f32.mrb[0].mxu0
        %v416 = vadd.f32 0.0, %v415
        %v417 = vpop.f32.mrb[0].mxu0
        %v418 = vpop.f32.mrb[0].mxu0
        %v419 = vadd.f32 0.0, %v418
        %v420 = vpop.f32.mrb[0].mxu0
        %421 = vmatprep.mubr.bf16.mxu0 0
        %422 = vmatmul.mubr.bf16.gmra.mrb[0].mxu0 %v290
        %v423 = vpop.f32.mrb[0].mxu0
        %v424 = vadd.f32 0.0, %v423
        %v425 = vpop.f32.mrb[0].mxu0
        %v426 = vpop.f32.mrb[0].mxu0
        %v427 = vadd.f32 0.0, %v426
        %v428 = vpop.f32.mrb[0].mxu0
        %429 = vmatprep.mubr.bf16.mxu0 0
        %430 = vmatmul.mubr.bf16.gmra.mrb[0].mxu0 %v291
        %v431 = vpop.f32.mrb[0].mxu0
        %v432 = vadd.f32 0.0, %v431
        %v433 = vpop.f32.mrb[0].mxu0
        %v434 = vpop.f32.mrb[0].mxu0
        %v435 = vadd.f32 0.0, %v434
        %v436 = vpop.f32.mrb[0].mxu0
        %437 = vmatprep.mubr.bf16.mxu0 0
        %438 = vmatmul.mubr.bf16.gmra.mrb[0].mxu0 %v292
        %v439 = vpop.f32.mrb[0].mxu0
        %v440 = vadd.f32 0.0, %v439
        %v441 = vpop.f32.mrb[0].mxu0
        %v442 = vpop.f32.mrb[0].mxu0
        %v443 = vadd.f32 0.0, %v442
        %v444 = vpop.f32.mrb[0].mxu0
        %445 = vdwg.mxu0
        %v446 = vadd.f32 %v205, %v384
        %v447 = vadd.f32 %v206, %v387
        %v448 = vadd.f32 %v207, %v392
        %v449 = vadd.f32 %v208, %v395
        %v450 = vadd.f32 %v209, %v400
        %v451 = vadd.f32 %v210, %v403
        %v452 = vadd.f32 %v211, %v408
        %v453 = vadd.f32 %v212, %v411
        %v454 = vadd.f32 %v213, %v416
        %v455 = vadd.f32 %v214, %v419
        %v456 = vadd.f32 %v215, %v424
        %v457 = vadd.f32 %v216, %v427
        %v458 = vadd.f32 %v217, %v432
        %v459 = vadd.f32 %v218, %v435
        %v460 = vadd.f32 %v219, %v440
        %v461 = vadd.f32 %v220, %v443
        %462 = vst [vmem:[#allocation2] sm:$0xff] %v446
        %463 = vst [vmem:[#allocation2 + $0x8] sm:$0xff] %v447
        %464 = vst [vmem:[#allocation2 + $0x10] sm:$0xff] %v448
        %465 = vst [vmem:[#allocation2 + $0x18] sm:$0xff] %v449
        %466 = vst [vmem:[#allocation2 + $0x20] sm:$0xff] %v450
        %467 = vst [vmem:[#allocation2 + $0x28] sm:$0xff] %v451
        %468 = vst [vmem:[#allocation2 + $0x30] sm:$0xff] %v452
        %469 = vst [vmem:[#allocation2 + $0x38] sm:$0xff] %v453
        %470 = vst [vmem:[#allocation2 + $0x40] sm:$0xff] %v454
        %471 = vst [vmem:[#allocation2 + $0x48] sm:$0xff] %v455
        %472 = vst [vmem:[#allocation2 + $0x50] sm:$0xff] %v456
        %473 = vst [vmem:[#allocation2 + $0x58] sm:$0xff] %v457
        %474 = vst [vmem:[#allocation2 + $0x60] sm:$0xff] %v458
        %475 = vst [vmem:[#allocation2 + $0x68] sm:$0xff] %v459
        %476 = vst [vmem:[#allocation2 + $0x70] sm:$0xff] %v460
        %477 = vst [vmem:[#allocation2 + $0x78] sm:$0xff] %v461
        %p478 = scmp.eq.s32.totalorder %s19, 2
        // Predicated region
        $region33: #{apply_stack.3} parent=27 // pred_check
          %p479 = pneg %p478
        $region34: #{apply_stack.3} parent=27 // pred_check_branch
          %481 = sbr.rel (%p479) target = $region36
        $region35: #{apply_stack.3} parent=27 // pred_region
          %v482 = vld [vmem:[#allocation2] sm:$0xff]
          %v483 = vld [vmem:[#allocation2 + $0x8] sm:$0xff]
          %v484 = vld [vmem:[#allocation2 + $0x10] sm:$0xff]
          %v485 = vld [vmem:[#allocation2 + $0x18] sm:$0xff]
          %v486 = vld [vmem:[#allocation2 + $0x20] sm:$0xff]
          %v487 = vld [vmem:[#allocation2 + $0x28] sm:$0xff]
          %v488 = vld [vmem:[#allocation2 + $0x30] sm:$0xff]
          %v489 = vld [vmem:[#allocation2 + $0x38] sm:$0xff]
          %v490 = vld [vmem:[#allocation2 + $0x40] sm:$0xff]
          %v491 = vld [vmem:[#allocation2 + $0x48] sm:$0xff]
          %v492 = vld [vmem:[#allocation2 + $0x50] sm:$0xff]
          %v493 = vld [vmem:[#allocation2 + $0x58] sm:$0xff]
          %v494 = vld [vmem:[#allocation2 + $0x60] sm:$0xff]
          %v495 = vld [vmem:[#allocation2 + $0x68] sm:$0xff]
          %v496 = vld [vmem:[#allocation2 + $0x70] sm:$0xff]
          %v497 = vld [vmem:[#allocation2 + $0x78] sm:$0xff]
          %498 = vst [vmem:[#allocation3] sm:$0xff] %v482
          %499 = vst [vmem:[#allocation3 + $0x8] sm:$0xff] %v483
          %500 = vst [vmem:[#allocation3 + $0x10] sm:$0xff] %v484
          %501 = vst [vmem:[#allocation3 + $0x18] sm:$0xff] %v485
          %502 = vst [vmem:[#allocation3 + $0x20] sm:$0xff] %v486
          %503 = vst [vmem:[#allocation3 + $0x28] sm:$0xff] %v487
          %504 = vst [vmem:[#allocation3 + $0x30] sm:$0xff] %v488
          %505 = vst [vmem:[#allocation3 + $0x38] sm:$0xff] %v489
          %506 = vst [vmem:[#allocation3 + $0x40] sm:$0xff] %v490
          %507 = vst [vmem:[#allocation3 + $0x48] sm:$0xff] %v491
          %508 = vst [vmem:[#allocation3 + $0x50] sm:$0xff] %v492
          %509 = vst [vmem:[#allocation3 + $0x58] sm:$0xff] %v493
          %510 = vst [vmem:[#allocation3 + $0x60] sm:$0xff] %v494
          %511 = vst [vmem:[#allocation3 + $0x68] sm:$0xff] %v495
          %512 = vst [vmem:[#allocation3 + $0x70] sm:$0xff] %v496
          %513 = vst [vmem:[#allocation3 + $0x78] sm:$0xff] %v497
        $region36: #{apply_stack.3} parent=27 // pred_fallthru
          _
        // Predicated region
        $region37: #{apply_stack.3} parent=27 // pred_check
          %p514 = pneg %p98
        $region38: #{apply_stack.3} parent=27 // pred_check_branch
          %516 = sbr.rel (%p514) target = $region40
        $region39: #{apply_stack.3} parent=27 // pred_region
          %s517 = smul.u32 16, %s18
          %s519 = ssub.s32 2048, 2048
          %520 = vsyncadd [#allocation4], %s519
          %s521 = smul.addr %s517, 128
          %s522 = scalar_lea.hbm %s2, %s521
          %s523 = sshll.u32 [#allocation3], 4
          %s524 = int_to_ptr.vmem [resolvable:$true] %s523
          %529 = dma.vmem_to_hbm [thread:$0]  %s524, 2048, %s522, [#allocation4], 128, 128, 8
        $region40: #{apply_stack.3} parent=27 // pred_fallthru
          _
        // Predicated region
        $region41: #{apply_stack.3} parent=27 // pred_check
          %p530 = pneg %p98
        $region42: #{apply_stack.3} parent=27 // pred_check_branch
          %532 = sbr.rel (%p530) target = $region44
        $region43: #{apply_stack.3} parent=27 // pred_region
          %533 = dma.done [#allocation4], 2048
        $region44: #{apply_stack.3} parent=27 // pred_fallthru
          _
      $region28: #{apply_stack.3} parent=5 // pred_fallthru
        _
      %p534 = scmp.le.s32.totalorder 2, %s9
      // Predicated region
      $region45: #{apply_stack.3} parent=5 // pred_check
        %p535 = pneg %p534
      $region46: #{apply_stack.3} parent=5 // pred_check_branch
        %537 = sbr.rel (%p535) target = $region48
      $region47: #{apply_stack.3} parent=5 // pred_region
        %s538 = ssub.s32 %s9, 2
      $region48: #{apply_stack.3} parent=5 // pred_fallthru
        _
    $region6: #{apply_stack.3} parent=1 // loop_footer
      %s13 = sadd.s32 1, %s9
    $region7: #{apply_stack.3} parent=1 // loop_footer_branch
      %8 = sbr.rel target = $region3
    $region8: #{apply_stack.3} parent=1 // loop_exit
      _
    %539 = vsyncpa [#allocation4], 1
    %s540 = scalar_lea.sflag [#allocation4], 1
    %541 = vsyncpa %s540, 1

// kernel: apply_stack.2
$region0: #{apply_stack.2}
  #allocation0 [shape = 'u32[]', space=smem, size = 0x4, offset = 0x4, fixed_abs, tag = 'smem constant byte address 0x4 - core index']
  #allocation1 [shape = 'u32[144,128]{1,0:T(1,128)}', space=vmem, size = 0x12000, scoped, tag = 'internal scratch']
  #allocation2 [shape = 'f32[128,128]{1,0:T(8,128)}', space=vmem, size = 0x10000, scoped, tag = 'scratch operand']
  %s0 = inlined_call_operand.vmem [shape: bf16[3,128,128], index: 0, kind: input, shape index: {}]
  %s1 = inlined_call_operand.vmem [shape: bf16[3,128,128], index: 1, kind: input, shape index: {}]
  %s2 = inlined_call_operand.vmem [shape: bf16[128,128], index: 2, kind: output, shape index: {}]
  %s3 = sld [smem:[#allocation0]]
  $region49: #{apply_stack.2} parent=0
    _
  %s5 = ssub.s32 1, %s3
  %s6 = scalar_select 0, %s5, %s3
  loop: start=0, step=1, limit=5
  $region2: #{apply_stack.2} parent=0 // loop_pre_header
    _
  $region3: #{apply_stack.2} parent=0 // loop_header
    %s8 = sphi 0, %s12
    %p9 = scmp.ge.s32.totalorder %s8, 5
    %s15 = sphi 0, %s27
    %s16 = sphi 0, %s23
    %s17 = sphi 0, %s15
    %s18 = sphi 0, %s16
    %s19 = sphi 0, %s17
    %s20 = sphi 0, %s18
    %s32 = sphi 0, %s34
    %s35 = sphi 0, %s32
    %s36 = sphi 0, %s35
    %s52 = sphi 0, %s36
    %s58 = sphi 0, %s60
    %s61 = sphi 0, %s58
    %s62 = sphi 0, %s61
    %s78 = sphi 0, %s62
    %s84 = sphi 0, %s86
    %s87 = sphi 0, %s84
    %s88 = sphi 0, %s87
    %s104 = sphi 0, %s88
  $region4: #{apply_stack.2} parent=0 // loop_header_branch
    %11 = sbr.rel (%p9) target = $region8
  $region5: #{apply_stack.2} parent=0 // loop_body
    %s13 = ssub.s32 %s8, 1
    %s14 = ssub.s32 %s8, 2
    %s21 = sadd.s32 1, %s16
    %p22 = scmp.ge.s32.totalorder %s21, 3
    %s23 = scalar_select %p22, 0, %s21
    %s24 = sadd.s32 1, %s15
    %s25 = scalar_select %p22, %s24, %s15
    %p26 = scmp.ge.s32.totalorder %s25, 1
    %s27 = scalar_select %p26, 0, %s25
    %s28 = ssub.s32 %s16, %s23
    %s29 = ssub.s32 %s15, %s27
    %s30 = sor.u32 %s28, %s29
    %p31 = scmp.eq.s32.totalorder %s30, 0
    %s33 = sadd.s32 %s32, 1
    %s34 = scalar_select %p31, %s32, %s33
    %p37 = pneg %p31
    %p38 = scmp.eq.s32.totalorder %s8, 2
    %p39 = por %p37, %p38
    %p40 = scmp.ne.s32.totalorder %s32, %s35
    %p41 = scmp.eq.s32.totalorder %s8, 0
    %p42 = por %p40, %p41
    %p43 = scmp.ne.s32.totalorder %s32, %s35
    %p44 = scmp.eq.s32.totalorder %s13, 2
    %p45 = por %p43, %p44
    %p46 = scmp.ne.s32.totalorder %s35, %s36
    %p47 = scmp.eq.s32.totalorder %s13, 0
    %p48 = por %p46, %p47
    %p49 = scmp.ne.s32.totalorder %s35, %s36
    %p50 = scmp.eq.s32.totalorder %s14, 2
    %p51 = por %p49, %p50
    %p53 = scmp.ne.s32.totalorder %s36, %s52
    %p54 = scmp.eq.s32.totalorder %s14, 0
    %p55 = por %p53, %p54
    %s56 = ssub.s32 %s16, %s23
    %p57 = scmp.eq.s32.totalorder %s56, 0
    %s59 = sadd.s32 %s58, 1
    %s60 = scalar_select %p57, %s58, %s59
    %p63 = pneg %p57
    %p64 = scmp.eq.s32.totalorder %s8, 2
    %p65 = por %p63, %p64
    %p66 = scmp.ne.s32.totalorder %s58, %s61
    %p67 = scmp.eq.s32.totalorder %s8, 0
    %p68 = por %p66, %p67
    %p69 = scmp.ne.s32.totalorder %s58, %s61
    %p70 = scmp.eq.s32.totalorder %s13, 2
    %p71 = por %p69, %p70
    %p72 = scmp.ne.s32.totalorder %s61, %s62
    %p73 = scmp.eq.s32.totalorder %s13, 0
    %p74 = por %p72, %p73
    %p75 = scmp.ne.s32.totalorder %s61, %s62
    %p76 = scmp.eq.s32.totalorder %s14, 2
    %p77 = por %p75, %p76
    %p79 = scmp.ne.s32.totalorder %s62, %s78
    %p80 = scmp.eq.s32.totalorder %s14, 0
    %p81 = por %p79, %p80
    %s82 = ssub.s32 %s15, %s27
    %p83 = scmp.eq.s32.totalorder %s82, 0
    %s85 = sadd.s32 %s84, 1
    %s86 = scalar_select %p83, %s84, %s85
    %p89 = pneg %p83
    %p90 = scmp.eq.s32.totalorder %s8, 2
    %p91 = por %p89, %p90
    %p92 = scmp.ne.s32.totalorder %s84, %s87
    %p93 = scmp.eq.s32.totalorder %s8, 0
    %p94 = por %p92, %p93
    %p95 = scmp.ne.s32.totalorder %s84, %s87
    %p96 = scmp.eq.s32.totalorder %s13, 2
    %p97 = por %p95, %p96
    %p98 = scmp.ne.s32.totalorder %s87, %s88
    %p99 = scmp.eq.s32.totalorder %s13, 0
    %p100 = por %p98, %p99
    %p101 = scmp.ne.s32.totalorder %s87, %s88
    %p102 = scmp.eq.s32.totalorder %s14, 2
    %p103 = por %p101, %p102
    %p105 = scmp.ne.s32.totalorder %s88, %s104
    %p106 = scmp.eq.s32.totalorder %s14, 0
    %p107 = por %p105, %p106
    %p108 = scmp.le.s32.totalorder 1, %s8
    %p109 = scmp.lt.s32.totalorder %s8, 4
    %p110 = pnand %p108, %p109
    %p111 = pneg %p110
    // Predicated region
    $region9: #{apply_stack.2} parent=5 // pred_check
      _
    $region10: #{apply_stack.2} parent=5 // pred_check_branch
      %113 = sbr.rel (%p110) target = $region12
    $region11: #{apply_stack.2} parent=5 // pred_region
      %s114 = ssub.s32 %s8, 1
    $region12: #{apply_stack.2} parent=5 // pred_fallthru
      _
    %p115 = scmp.lt.s32.totalorder %s8, 3
    // Predicated region
    $region13: #{apply_stack.2} parent=5 // pred_check
      %p116 = pneg %p115
    $region14: #{apply_stack.2} parent=5 // pred_check_branch
      %118 = sbr.rel (%p116) target = $region16
    $region15: #{apply_stack.2} parent=5 // pred_region
      // Predicated region
      $region17: #{apply_stack.2} parent=15 // pred_check
        %p119 = pneg %p42
      $region18: #{apply_stack.2} parent=15 // pred_check_branch
        %121 = sbr.rel (%p119) target = $region20
      $region19: #{apply_stack.2} parent=15 // pred_region
        %s122 = smul.u32 16, %s15
        %p123 = scmp.lt.s32.totalorder %s16, 2
        %s124 = scalar_select %p123, %s16, 2
        %p125 = scmp.lt.s32.totalorder %s122, 15
        %s126 = scalar_select %p125, %s122, 15
        %s127 = smul.addr %s124, 16
        %s128 = sadd.s32 %s126, %s127
        %s129 = smul.addr %s128, 4
        %s130 = scalar_lea.vmem %s0, %s129
        %s131 = smul.u32 16, %s15
      $region20: #{apply_stack.2} parent=15 // pred_fallthru
        _
      // Predicated region
      $region21: #{apply_stack.2} parent=15 // pred_check
        %p132 = pneg %p68
      $region22: #{apply_stack.2} parent=15 // pred_check_branch
        %134 = sbr.rel (%p132) target = $region24
      $region23: #{apply_stack.2} parent=15 // pred_region
        %p135 = scmp.lt.s32.totalorder %s16, 2
        %s136 = scalar_select %p135, %s16, 2
        %s137 = smul.addr %s136, 16
        %s138 = smul.addr %s137, 4
        %s139 = scalar_lea.vmem %s1, %s138
      $region24: #{apply_stack.2} parent=15 // pred_fallthru
        _
    $region16: #{apply_stack.2} parent=5 // pred_fallthru
      _
    %p140 = scmp.le.s32.totalorder 1, %s8
    %p141 = scmp.lt.s32.totalorder %s8, 4
    %p142 = pnand %p140, %p141
    %p143 = pneg %p142
    // Predicated region
    $region25: #{apply_stack.2} parent=5 // pred_check
      _
    $region26: #{apply_stack.2} parent=5 // pred_check_branch
      %145 = sbr.rel (%p142) target = $region28
    $region27: #{apply_stack.2} parent=5 // pred_region
      %s146 = ssub.s32 %s8, 1
      %s147 = smul.u32 16, %s17
      %p148 = scmp.lt.s32.totalorder %s18, 2
      %s149 = scalar_select %p148, %s18, 2
      %p150 = scmp.lt.s32.totalorder %s147, 15
      %s151 = scalar_select %p150, %s147, 15
      %s152 = smul.addr %s149, 16
      %s153 = sadd.s32 %s151, %s152
      %s154 = smul.addr %s153, 4
      %s155 = scalar_lea.vmem %s0, %s154
      %p156 = pneg %p48
      %p157 = pneg %p45
      %p158 = scmp.lt.s32.totalorder %s18, 2
      %s159 = scalar_select %p158, %s18, 2
      %s160 = smul.addr %s159, 16
      %s161 = smul.addr %s160, 4
      %s162 = scalar_lea.vmem %s1, %s161
      %p163 = pneg %p74
      %p164 = pneg %p71
      %p165 = pneg %p100
      %p166 = pneg %p97
      %s167 = smul.u32 8, %s17
      %p168 = scmp.lt.s32.totalorder %s167, 7
      %s169 = scalar_select %p168, %s167, 7
      %s170 = smul.addr %s169, 8
      %s171 = scalar_lea.vmem %s2, %s170
      %s172 = smul.u32 16, %s17
      %p173 = scmp.lt.s32.totalorder %s18, 2
      %s174 = scalar_select %p173, %s18, 2
      %p175 = scmp.lt.s32.totalorder %s172, 15
      %s176 = scalar_select %p175, %s172, 15
      %s177 = smul.addr %s174, 16
      %s178 = sadd.s32 %s176, %s177
      %s179 = smul.addr %s178, 4
      %s180 = scalar_lea.vmem %s0, %s179
      %s181 = smul.u32 16, %s17
      %p182 = scmp.lt.s32.totalorder %s18, 2
      %s183 = scalar_select %p182, %s18, 2
      %s184 = smul.addr %s183, 16
      %s185 = smul.addr %s184, 4
      %s186 = scalar_lea.vmem %s1, %s185
      %s187 = smul.u32 8, %s17
      %p188 = scmp.lt.s32.totalorder %s187, 7
      %s189 = scalar_select %p188, %s187, 7
      %s190 = smul.addr %s189, 8
      %s191 = scalar_lea.vmem %s2, %s190
      %s192 = smul.u32 8, %s17
      %p194 = scmp.eq.s32.totalorder %s18, 0
      // Predicated region
      $region29: #{apply_stack.2} parent=27 // pred_check
        %p195 = pneg %p194
      $region30: #{apply_stack.2} parent=27 // pred_check_branch
        %197 = sbr.rel (%p195) target = $region32
      $region31: #{apply_stack.2} parent=27 // pred_region
        %198 = vst [vmem:[#allocation2] sm:$0xff] 0.0
        %199 = vst [vmem:[#allocation2 + $0x8] sm:$0xff] 0.0
        %200 = vst [vmem:[#allocation2 + $0x10] sm:$0xff] 0.0
        %201 = vst [vmem:[#allocation2 + $0x18] sm:$0xff] 0.0
        %202 = vst [vmem:[#allocation2 + $0x20] sm:$0xff] 0.0
        %203 = vst [vmem:[#allocation2 + $0x28] sm:$0xff] 0.0
        %204 = vst [vmem:[#allocation2 + $0x30] sm:$0xff] 0.0
        %205 = vst [vmem:[#allocation2 + $0x38] sm:$0xff] 0.0
        %206 = vst [vmem:[#allocation2 + $0x40] sm:$0xff] 0.0
        %207 = vst [vmem:[#allocation2 + $0x48] sm:$0xff] 0.0
        %208 = vst [vmem:[#allocation2 + $0x50] sm:$0xff] 0.0
        %209 = vst [vmem:[#allocation2 + $0x58] sm:$0xff] 0.0
        %210 = vst [vmem:[#allocation2 + $0x60] sm:$0xff] 0.0
        %211 = vst [vmem:[#allocation2 + $0x68] sm:$0xff] 0.0
        %212 = vst [vmem:[#allocation2 + $0x70] sm:$0xff] 0.0
        %213 = vst [vmem:[#allocation2 + $0x78] sm:$0xff] 0.0
      $region32: #{apply_stack.2} parent=27 // pred_fallthru
        _
      %v214 = vld [vmem:[#allocation2] sm:$0xff]
      %v215 = vld [vmem:[#allocation2 + $0x8] sm:$0xff]
      %v216 = vld [vmem:[#allocation2 + $0x10] sm:$0xff]
      %v217 = vld [vmem:[#allocation2 + $0x18] sm:$0xff]
      %v218 = vld [vmem:[#allocation2 + $0x20] sm:$0xff]
      %v219 = vld [vmem:[#allocation2 + $0x28] sm:$0xff]
      %v220 = vld [vmem:[#allocation2 + $0x30] sm:$0xff]
      %v221 = vld [vmem:[#allocation2 + $0x38] sm:$0xff]
      %v222 = vld [vmem:[#allocation2 + $0x40] sm:$0xff]
      %v223 = vld [vmem:[#allocation2 + $0x48] sm:$0xff]
      %v224 = vld [vmem:[#allocation2 + $0x50] sm:$0xff]
      %v225 = vld [vmem:[#allocation2 + $0x58] sm:$0xff]
      %v226 = vld [vmem:[#allocation2 + $0x60] sm:$0xff]
      %v227 = vld [vmem:[#allocation2 + $0x68] sm:$0xff]
      %v228 = vld [vmem:[#allocation2 + $0x70] sm:$0xff]
      %v229 = vld [vmem:[#allocation2 + $0x78] sm:$0xff]
      %v230 = vld [vmem:[%s180] sm:$0xf]
      %v231 = vld [vmem:[%s180 + $0x4] sm:$0xf]
      %v232 = vld [vmem:[%s180 + $0x8] sm:$0xf]
      %v233 = vld [vmem:[%s180 + $0xc] sm:$0xf]
      %v234 = vld [vmem:[%s180 + $0x10] sm:$0xf]
      %v235 = vld [vmem:[%s180 + $0x14] sm:$0xf]
      %v236 = vld [vmem:[%s180 + $0x18] sm:$0xf]
      %v237 = vld [vmem:[%s180 + $0x1c] sm:$0xf]
      %v238 = vld [vmem:[%s180 + $0x20] sm:$0xf]
      %v239 = vld [vmem:[%s180 + $0x24] sm:$0xf]
      %v240 = vld [vmem:[%s180 + $0x28] sm:$0xf]
      %v241 = vld [vmem:[%s180 + $0x2c] sm:$0xf]
      %v242 = vld [vmem:[%s180 + $0x30] sm:$0xf]
      %v243 = vld [vmem:[%s180 + $0x34] sm:$0xf]
      %v244 = vld [vmem:[%s180 + $0x38] sm:$0xf]
      %v245 = vld [vmem:[%s180 + $0x3c] sm:$0xf]
      %v246 = vld [vmem:[%s186] sm:$0xf]
      %v247 = vld [vmem:[%s186 + $0x4] sm:$0xf]
      %v248 = vld [vmem:[%s186 + $0x8] sm:$0xf]
      %v249 = vld [vmem:[%s186 + $0xc] sm:$0xf]
      %v250 = vld [vmem:[%s186 + $0x10] sm:$0xf]
      %v251 = vld [vmem:[%s186 + $0x14] sm:$0xf]
      %v252 = vld [vmem:[%s186 + $0x18] sm:$0xf]
      %v253 = vld [vmem:[%s186 + $0x1c] sm:$0xf]
      %v254 = vld [vmem:[%s186 + $0x20] sm:$0xf]
      %v255 = vld [vmem:[%s186 + $0x24] sm:$0xf]
      %v256 = vld [vmem:[%s186 + $0x28] sm:$0xf]
      %v257 = vld [vmem:[%s186 + $0x2c] sm:$0xf]
      %v258 = vld [vmem:[%s186 + $0x30] sm:$0xf]
      %v259 = vld [vmem:[%s186 + $0x34] sm:$0xf]
      %v260 = vld [vmem:[%s186 + $0x38] sm:$0xf]
      %v261 = vld [vmem:[%s186 + $0x3c] sm:$0xf]
      %v278 = vunpack.c.l.b16 %v230
      %v279 = vunpack.c.l.b16 %v231
      %v280 = vunpack.c.l.b16 %v232
      %v281 = vunpack.c.l.b16 %v233
      %v282 = vunpack.c.l.b16 %v234
      %v283 = vunpack.c.l.b16 %v235
      %v284 = vunpack.c.l.b16 %v236
      %v285 = vunpack.c.l.b16 %v237
      %v286 = vunpack.c.l.b16 %v238
      %v287 = vunpack.c.l.b16 %v239
      %v288 = vunpack.c.l.b16 %v240
      %v289 = vunpack.c.l.b16 %v241
      %v290 = vunpack.c.l.b16 %v242
      %v291 = vunpack.c.l.b16 %v243
      %v292 = vunpack.c.l.b16 %v244
      %v293 = vunpack.c.l.b16 %v245
      %v294 = vpack.c.b16 %v279, %v278
      %v295 = vpack.c.b16 %v281, %v280
      %v296 = vpack.c.b16 %v283, %v282
      %v297 = vpack.c.b16 %v285, %v284
      %v298 = vpack.c.b16 %v287, %v286
      %v299 = vpack.c.b16 %v289, %v288
      %v300 = vpack.c.b16 %v291, %v290
      %v301 = vpack.c.b16 %v293, %v292
      %v326 = vunpack.c.l.b16 %v246
      %v327 = vunpack.c.l.b16 %v247
      %v328 = vunpack.c.l.b16 %v248
      %v329 = vunpack.c.l.b16 %v249
      %v330 = vunpack.c.l.b16 %v250
      %v331 = vunpack.c.l.b16 %v251
      %v332 = vunpack.c.l.b16 %v252
      %v333 = vunpack.c.l.b16 %v253
      %v334 = vunpack.c.l.b16 %v254
      %v335 = vunpack.c.l.b16 %v255
      %v336 = vunpack.c.l.b16 %v256
      %v337 = vunpack.c.l.b16 %v257
      %v338 = vunpack.c.l.b16 %v258
      %v339 = vunpack.c.l.b16 %v259
      %v340 = vunpack.c.l.b16 %v260
      %v341 = vunpack.c.l.b16 %v261
      %v342 = vpack.c.b16 %v327, %v326
      %v343 = vpack.c.b16 %v329, %v328
      %v344 = vpack.c.b16 %v331, %v330
      %v345 = vpack.c.b16 %v333, %v332
      %v346 = vpack.c.b16 %v335, %v334
      %v347 = vpack.c.b16 %v337, %v336
      %v348 = vpack.c.b16 %v339, %v338
      %v349 = vpack.c.b16 %v341, %v340
      %358 = vmatprep.subr.bf16.mxu0 0
      %359 = vmatpush1.bf16.msra.mxu0 %v342
      %360 = vmatprep.subr.bf16.mxu0 0
      %361 = vmatpush1.bf16.msra.mxu0 %v343
      %362 = vmatprep.subr.bf16.mxu0 0
      %363 = vmatpush1.bf16.msra.mxu0 %v344
      %364 = vmatprep.subr.bf16.mxu0 0
      %365 = vmatpush1.bf16.msra.mxu0 %v345
      %366 = vmatprep.subr.bf16.mxu0 0
      %367 = vmatpush1.bf16.msra.mxu0 %v346
      %368 = vmatprep.subr.bf16.mxu0 0
      %369 = vmatpush1.bf16.msra.mxu0 %v347
      %370 = vmatprep.subr.bf16.mxu0 0
      %371 = vmatpush1.bf16.msra.mxu0 %v348
      %372 = vmatprep.subr.bf16.mxu0 0
      %373 = vmatpush1.bf16.msra.mxu0 %v349
      %374 = vmatprep.subr.bf16.mxu0 0
      %375 = vmatpush1.bf16.msra.mxu0 0
      %376 = vmatprep.subr.bf16.mxu0 0
      %377 = vmatpush1.bf16.msra.mxu0 0
      %378 = vmatprep.subr.bf16.mxu0 0
      %379 = vmatpush1.bf16.msra.mxu0 0
      %380 = vmatprep.subr.bf16.mxu0 0
      %381 = vmatpush1.bf16.msra.mxu0 0
      %382 = vmatprep.subr.bf16.mxu0 0
      %383 = vmatpush1.bf16.msra.mxu0 0
      %384 = vmatprep.subr.bf16.mxu0 0
      %385 = vmatpush1.bf16.msra.mxu0 0
      %386 = vmatprep.subr.bf16.mxu0 0
      %387 = vmatpush1.bf16.msra.mxu0 0
      %388 = vmatprep.subr.bf16.mxu0 0
      %389 = vmatpush1.bf16.msra.mxu0 0
      %390 = vmatprep.mubr.bf16.mxu0 0
      %391 = vmatmul.mubr.bf16.gmra.mrb[0].mxu0 %v294
      %v392 = vpop.f32.mrb[0].mxu0
      %v393 = vadd.f32 0.0, %v392
      %v394 = vpop.f32.mrb[0].mxu0
      %v395 = vpop.f32.mrb[0].mxu0
      %v396 = vadd.f32 0.0, %v395
      %v397 = vpop.f32.mrb[0].mxu0
      %398 = vmatprep.mubr.bf16.mxu0 0
      %399 = vmatmul.mubr.bf16.gmra.mrb[0].mxu0 %v295
      %v400 = vpop.f32.mrb[0].mxu0
      %v401 = vadd.f32 0.0, %v400
      %v402 = vpop.f32.mrb[0].mxu0
      %v403 = vpop.f32.mrb[0].mxu0
      %v404 = vadd.f32 0.0, %v403
      %v405 = vpop.f32.mrb[0].mxu0
      %406 = vmatprep.mubr.bf16.mxu0 0
      %407 = vmatmul.mubr.bf16.gmra.mrb[0].mxu0 %v296
      %v408 = vpop.f32.mrb[0].mxu0
      %v409 = vadd.f32 0.0, %v408
      %v410 = vpop.f32.mrb[0].mxu0
      %v411 = vpop.f32.mrb[0].mxu0
      %v412 = vadd.f32 0.0, %v411
      %v413 = vpop.f32.mrb[0].mxu0
      %414 = vmatprep.mubr.bf16.mxu0 0
      %415 = vmatmul.mubr.bf16.gmra.mrb[0].mxu0 %v297
      %v416 = vpop.f32.mrb[0].mxu0
      %v417 = vadd.f32 0.0, %v416
      %v418 = vpop.f32.mrb[0].mxu0
      %v419 = vpop.f32.mrb[0].mxu0
      %v420 = vadd.f32 0.0, %v419
      %v421 = vpop.f32.mrb[0].mxu0
      %422 = vmatprep.mubr.bf16.mxu0 0
      %423 = vmatmul.mubr.bf16.gmra.mrb[0].mxu0 %v298
      %v424 = vpop.f32.mrb[0].mxu0
      %v425 = vadd.f32 0.0, %v424
      %v426 = vpop.f32.mrb[0].mxu0
      %v427 = vpop.f32.mrb[0].mxu0
      %v428 = vadd.f32 0.0, %v427
      %v429 = vpop.f32.mrb[0].mxu0
      %430 = vmatprep.mubr.bf16.mxu0 0
      %431 = vmatmul.mubr.bf16.gmra.mrb[0].mxu0 %v299
      %v432 = vpop.f32.mrb[0].mxu0
      %v433 = vadd.f32 0.0, %v432
      %v434 = vpop.f32.mrb[0].mxu0
      %v435 = vpop.f32.mrb[0].mxu0
      %v436 = vadd.f32 0.0, %v435
      %v437 = vpop.f32.mrb[0].mxu0
      %438 = vmatprep.mubr.bf16.mxu0 0
      %439 = vmatmul.mubr.bf16.gmra.mrb[0].mxu0 %v300
      %v440 = vpop.f32.mrb[0].mxu0
      %v441 = vadd.f32 0.0, %v440
      %v442 = vpop.f32.mrb[0].mxu0
      %v443 = vpop.f32.mrb[0].mxu0
      %v444 = vadd.f32 0.0, %v443
      %v445 = vpop.f32.mrb[0].mxu0
      %446 = vmatprep.mubr.bf16.mxu0 0
      %447 = vmatmul.mubr.bf16.gmra.mrb[0].mxu0 %v301
      %v448 = vpop.f32.mrb[0].mxu0
      %v449 = vadd.f32 0.0, %v448
      %v450 = vpop.f32.mrb[0].mxu0
      %v451 = vpop.f32.mrb[0].mxu0
      %v452 = vadd.f32 0.0, %v451
      %v453 = vpop.f32.mrb[0].mxu0
      %454 = vdwg.mxu0
      %v455 = vadd.f32 %v214, %v393
      %v456 = vadd.f32 %v215, %v396
      %v457 = vadd.f32 %v216, %v401
      %v458 = vadd.f32 %v217, %v404
      %v459 = vadd.f32 %v218, %v409
      %v460 = vadd.f32 %v219, %v412
      %v461 = vadd.f32 %v220, %v417
      %v462 = vadd.f32 %v221, %v420
      %v463 = vadd.f32 %v222, %v425
      %v464 = vadd.f32 %v223, %v428
      %v465 = vadd.f32 %v224, %v433
      %v466 = vadd.f32 %v225, %v436
      %v467 = vadd.f32 %v226, %v441
      %v468 = vadd.f32 %v227, %v444
      %v469 = vadd.f32 %v228, %v449
      %v470 = vadd.f32 %v229, %v452
      %471 = vst [vmem:[#allocation2] sm:$0xff] %v455
      %472 = vst [vmem:[#allocation2 + $0x8] sm:$0xff] %v456
      %473 = vst [vmem:[#allocation2 + $0x10] sm:$0xff] %v457
      %474 = vst [vmem:[#allocation2 + $0x18] sm:$0xff] %v458
      %475 = vst [vmem:[#allocation2 + $0x20] sm:$0xff] %v459
      %476 = vst [vmem:[#allocation2 + $0x28] sm:$0xff] %v460
      %477 = vst [vmem:[#allocation2 + $0x30] sm:$0xff] %v461
      %478 = vst [vmem:[#allocation2 + $0x38] sm:$0xff] %v462
      %479 = vst [vmem:[#allocation2 + $0x40] sm:$0xff] %v463
      %480 = vst [vmem:[#allocation2 + $0x48] sm:$0xff] %v464
      %481 = vst [vmem:[#allocation2 + $0x50] sm:$0xff] %v465
      %482 = vst [vmem:[#allocation2 + $0x58] sm:$0xff] %v466
      %483 = vst [vmem:[#allocation2 + $0x60] sm:$0xff] %v467
      %484 = vst [vmem:[#allocation2 + $0x68] sm:$0xff] %v468
      %485 = vst [vmem:[#allocation2 + $0x70] sm:$0xff] %v469
      %486 = vst [vmem:[#allocation2 + $0x78] sm:$0xff] %v470
      %p487 = scmp.eq.s32.totalorder %s18, 2
      // Predicated region
      $region33: #{apply_stack.2} parent=27 // pred_check
        %p488 = pneg %p487
      $region34: #{apply_stack.2} parent=27 // pred_check_branch
        %490 = sbr.rel (%p488) target = $region36
      $region35: #{apply_stack.2} parent=27 // pred_region
        %v491 = vld [vmem:[#allocation2] sm:$0xff]
        %v492 = vld [vmem:[#allocation2 + $0x8] sm:$0xff]
        %v493 = vld [vmem:[#allocation2 + $0x10] sm:$0xff]
        %v494 = vld [vmem:[#allocation2 + $0x18] sm:$0xff]
        %v495 = vld [vmem:[#allocation2 + $0x20] sm:$0xff]
        %v496 = vld [vmem:[#allocation2 + $0x28] sm:$0xff]
        %v497 = vld [vmem:[#allocation2 + $0x30] sm:$0xff]
        %v498 = vld [vmem:[#allocation2 + $0x38] sm:$0xff]
        %v499 = vld [vmem:[#allocation2 + $0x40] sm:$0xff]
        %v500 = vld [vmem:[#allocation2 + $0x48] sm:$0xff]
        %v501 = vld [vmem:[#allocation2 + $0x50] sm:$0xff]
        %v502 = vld [vmem:[#allocation2 + $0x58] sm:$0xff]
        %v503 = vld [vmem:[#allocation2 + $0x60] sm:$0xff]
        %v504 = vld [vmem:[#allocation2 + $0x68] sm:$0xff]
        %v505 = vld [vmem:[#allocation2 + $0x70] sm:$0xff]
        %v506 = vld [vmem:[#allocation2 + $0x78] sm:$0xff]
        %v507 = vmax.f32 %v491, 0.0
        %v508 = vmax.f32 %v492, 0.0
        %v509 = vmax.f32 %v493, 0.0
        %v510 = vmax.f32 %v494, 0.0
        %v511 = vmax.f32 %v495, 0.0
        %v512 = vmax.f32 %v496, 0.0
        %v513 = vmax.f32 %v497, 0.0
        %v514 = vmax.f32 %v498, 0.0
        %v515 = vmax.f32 %v499, 0.0
        %v516 = vmax.f32 %v500, 0.0
        %v517 = vmax.f32 %v501, 0.0
        %v518 = vmax.f32 %v502, 0.0
        %v519 = vmax.f32 %v503, 0.0
        %v520 = vmax.f32 %v504, 0.0
        %v521 = vmax.f32 %v505, 0.0
        %v522 = vmax.f32 %v506, 0.0
        %v523 = vpack.c.bf16 %v508, %v507
        %v524 = vpack.c.bf16 %v510, %v509
        %v525 = vpack.c.bf16 %v512, %v511
        %v526 = vpack.c.bf16 %v514, %v513
        %v527 = vpack.c.bf16 %v516, %v515
        %v528 = vpack.c.bf16 %v518, %v517
        %v529 = vpack.c.bf16 %v520, %v519
        %v530 = vpack.c.bf16 %v522, %v521
        %531 = vst [vmem:[%s191] sm:$0xff] %v523
        %532 = vst [vmem:[%s191 + $0x8] sm:$0xff] %v524
        %533 = vst [vmem:[%s191 + $0x10] sm:$0xff] %v525
        %534 = vst [vmem:[%s191 + $0x18] sm:$0xff] %v526
        %535 = vst [vmem:[%s191 + $0x20] sm:$0xff] %v527
        %536 = vst [vmem:[%s191 + $0x28] sm:$0xff] %v528
        %537 = vst [vmem:[%s191 + $0x30] sm:$0xff] %v529
        %538 = vst [vmem:[%s191 + $0x38] sm:$0xff] %v530
      $region36: #{apply_stack.2} parent=27 // pred_fallthru
        _
      %s539 = smul.u32 8, %s17
      %p540 = scmp.lt.s32.totalorder %s539, 7
      %s541 = scalar_select %p540, %s539, 7
      %s542 = smul.addr %s541, 8
      %s543 = scalar_lea.vmem %s2, %s542
      // Predicated region
      $region37: #{apply_stack.2} parent=27 // pred_check
        %p544 = pneg %p97
      $region38: #{apply_stack.2} parent=27 // pred_check_branch
        %546 = sbr.rel (%p544) target = $region40
      $region39: #{apply_stack.2} parent=27 // pred_region
        %s547 = smul.u32 8, %s17
      $region40: #{apply_stack.2} parent=27 // pred_fallthru
        _
      // Predicated region
      $region41: #{apply_stack.2} parent=27 // pred_check
        %p548 = pneg %p97
      $region42: #{apply_stack.2} parent=27 // pred_check_branch
        %550 = sbr.rel (%p548) target = $region44
      $region43: #{apply_stack.2} parent=27 // pred_region
        %s551 = smul.u32 8, %s17
        %p552 = scmp.lt.s32.totalorder %s551, 7
        %s553 = scalar_select %p552, %s551, 7
        %s554 = smul.addr %s553, 8
        %s555 = scalar_lea.vmem %s2, %s554
      $region44: #{apply_stack.2} parent=27 // pred_fallthru
        _
    $region28: #{apply_stack.2} parent=5 // pred_fallthru
      _
    %p556 = scmp.le.s32.totalorder 2, %s8
    // Predicated region
    $region45: #{apply_stack.2} parent=5 // pred_check
      %p557 = pneg %p556
    $region46: #{apply_stack.2} parent=5 // pred_check_branch
      %559 = sbr.rel (%p557) target = $region48
    $region47: #{apply_stack.2} parent=5 // pred_region
      %s560 = ssub.s32 %s8, 2
    $region48: #{apply_stack.2} parent=5 // pred_fallthru
      _
  $region6: #{apply_stack.2} parent=0 // loop_footer
    %s12 = sadd.s32 1, %s8
  $region7: #{apply_stack.2} parent=0 // loop_footer_branch
    %7 = sbr.rel target = $region3
  $region8: #{apply_stack.2} parent=0 // loop_exit
    _

</llo_original>
